<compile_context>
chip_gen: v7x
topology: tpu7x:2x2x1
jax: 0.10.0
libtpu: 0.0.40
codegen_flags: <defaults>
</compile_context>

<pallas_src>
import numpy as np
import jax
import jax.numpy as jnp
from jax.experimental import pallas as pl
from jax.experimental.pallas import tpu as pltpu

# ---- model hyper-parameters (small, consistent with the module) -------------
D_IN = 16          # input sequence length
C_IN = 4           # input channels
BATCH = 2
F = 3              # conv kernel size
C1, C2 = 6, 16
HID, NCLS = 30, 2
EPS = 1e-5         # BatchNorm eps


def _calc_dim(d, f, s):
    return (d - f) // s + 1


L1 = _calc_dim(D_IN, F, 1)   # 14
P1 = L1 // 2                 # 7
L2 = _calc_dim(P1, F, 1)     # 5
P2 = L2 // 2                 # 2
FLAT = C2 * P2               # 32

LANES = 128
HALF = 64

# ---- packed parameter slab layout (all blocks start at 8-row boundaries) ----
_R_VEC = 0                   # 8 rows: per-lane bias / BN-scale / BN-shift vectors
_R_T1 = 8                    # 64 rows: conv1 Toeplitz  (reads 64 lanes, writes 128)
_R_T2 = _R_T1 + 64           # 72
_R_WL1 = _R_T2 + 64          # 136
_R_WL2 = _R_WL1 + 64         # 200  (32 rows)
_SLAB_ROWS = _R_WL2 + 32     # 232

# rows inside the 8-row vector tile
_V_B1, _V_S1, _V_T1 = 0, 1, 2
_V_B2, _V_S2, _V_T2 = 3, 4, 5
_V_BL1, _V_BL2 = 6, 7


# ---- the Pallas kernel: whole forward pass, 4 MXU dots + VPU work ------------
def ecg_kernel(x_ref, slab_ref, out_ref):
    xf = x_ref[...]                               # (N, 64) native-NCL flattened input
    vec = slab_ref[_R_VEC:_R_VEC + 8, :]          # (8, 128) packed per-lane params

    def affine(y, b_row, s_row, t_row):
        # bias + ReLU + eval-mode BN; zero-padded lanes stay exactly zero.
        y = jnp.maximum(y + vec[b_row:b_row + 1, :], 0.0)
        return y * vec[s_row:s_row + 1, :] + vec[t_row:t_row + 1, :]

    def pool(y):
        # maxpool(2): partners were placed in the two 64-lane halves by the
        # prep-time column permutation -> one lane slice + one VPU max.
        return jnp.maximum(y[:, :HALF], y[:, HALF:])

    # block 1: conv (Toeplitz matmul) -> bias/relu/bn -> pool     -> (N, 64)
    y1 = jnp.dot(xf, slab_ref[_R_T1:_R_T1 + 64, :],
                 preferred_element_type=jnp.float32)              # (N, 128)
    h1 = pool(affine(y1, _V_B1, _V_S1, _V_T1))

    # block 2: conv -> bias/relu/bn -> pool                       -> (N, 64)
    y2 = jnp.dot(h1, slab_ref[_R_T2:_R_T2 + 64, :],
                 preferred_element_type=jnp.float32)              # (N, 128)
    h2 = pool(affine(y2, _V_B2, _V_S2, _V_T2))

    # lin1 -> relu (flatten is implicit: h2's lane layout matches WL1's rows)
    z = jnp.dot(h2, slab_ref[_R_WL1:_R_WL1 + 64, :],
                preferred_element_type=jnp.float32)               # (N, 128)
    z = jnp.maximum(z + vec[_V_BL1:_V_BL1 + 1, :], 0.0)

    # lin2
    o = jnp.dot(z[:, :32], slab_ref[_R_WL2:_R_WL2 + 32, :],
                preferred_element_type=jnp.float32)               # (N, 128)
    o = o + vec[_V_BL2:_V_BL2 + 1, :]
    out_ref[...] = o[:, :NCLS]


# ---- one-time parameter preparation (all permutes / Toeplitz builds hoisted) -
def prepare_params(params):
    (w1, b1, g1, be1, rm1, rv1,
     w2, b2, g2, be2, rm2, rv2,
     wl1, bl1, wl2, bl2) = params

    # eval-mode BN folded to scale/shift (ReLU sits between conv and BN, so BN
    # can only be folded into a per-channel mul-add, not into the conv weights)
    s1 = g1 * jax.lax.rsqrt(rv1 + EPS)
    t1 = be1 - rm1 * s1
    s2 = g2 * jax.lax.rsqrt(rv2 + EPS)
    t2 = be2 - rm2 * s2

    # conv1 block-Toeplitz: rows = native NCL flatten index ci*D_IN + d,
    # cols = j*64 + p*C1 + co with output position l1 = 2p + j (pool pairs in
    # the two 64-lane halves).
    rows, cols, sel = [], [], []
    for j in range(2):
        for p in range(P1):
            l1 = 2 * p + j
            for co in range(C1):
                col = j * HALF + p * C1 + co
                for ci in range(C_IN):
                    for k in range(F):
                        rows.append(ci * D_IN + l1 + k)
                        cols.append(col)
                        sel.append((co, ci, k))
    sel = np.asarray(sel)
    t1w = jnp.zeros((C_IN * D_IN, LANES), jnp.float32).at[
        np.asarray(rows), np.asarray(cols)].set(
            w1[sel[:, 0], sel[:, 1], sel[:, 2]].astype(jnp.float32))

    # conv2 block-Toeplitz: rows = pooled layout p1*C1 + c1 (rows >= 42 zero),
    # cols = j*64 + p*C2 + co with output position l2 = 2p + j (only l2<4 is
    # ever pooled, so l2=4 is never computed).
    rows, cols, sel = [], [], []
    for j in range(2):
        for p in range(P2):
            l2 = 2 * p + j
            for co in range(C2):
                col = j * HALF + p * C2 + co
                for c1 in range(C1):
                    for k in range(F):
                        rows.append((l2 + k) * C1 + c1)
                        cols.append(col)
                        sel.append((co, c1, k))
    sel = np.asarray(sel)
    t2w = jnp.zeros((HALF, LANES), jnp.float32).at[
        np.asarray(rows), np.asarray(cols)].set(
            w2[sel[:, 0], sel[:, 1], sel[:, 2]].astype(jnp.float32))

    # lin1: PyTorch channel-major flatten (co*P2 + p2) -> our p2*C2 + co rows.
    wl1_core = jnp.transpose(wl1.reshape(HID, C2, P2), (2, 1, 0)).reshape(FLAT, HID)
    wl1_pad = jnp.pad(wl1_core, ((0, HALF - FLAT), (0, LANES - HID)))

    # lin2: (NCLS, HID) -> (HID, NCLS), padded to (32, 128).
    wl2_pad = jnp.pad(jnp.transpose(wl2), ((0, 32 - HID), (0, LANES - NCLS)))

    # per-lane vectors expanded to the activation lane layouts (zero-padded).
    def expand1(v):            # block-1 layout: j*64 + p*6 + c
        half = jnp.pad(jnp.tile(v, P1), (0, HALF - P1 * C1))
        return jnp.concatenate([half, half])

    def expand2(v):            # block-2 layout: j*64 + p*16 + co
        half = jnp.pad(jnp.tile(v, P2), (0, HALF - P2 * C2))
        return jnp.concatenate([half, half])

    def padlane(v):
        return jnp.pad(v, (0, LANES - v.shape[0]))

    vec = jnp.stack([expand1(b1), expand1(s1), expand1(t1),
                     expand2(b2), expand2(s2), expand2(t2),
                     padlane(bl1), padlane(bl2)]).astype(jnp.float32)

    slab = jnp.concatenate([vec, t1w, t2w, wl1_pad, wl2_pad], axis=0)
    assert slab.shape == (_SLAB_ROWS, LANES)
    return slab


# ---- wrapper: single pallas_call, 2 operands, no grid ------------------------
def simple_net_forward(x_ncl, slab):
    """x_ncl: (N, C_IN, D_IN) float32 in PyTorch NCL layout."""
    n = x_ncl.shape[0]
    # pure metadata reshape of the contiguous NCL tensor (no transpose launch);
    # the conv1 Toeplitz weight consumes this native flatten order directly.
    xf = jnp.reshape(x_ncl, (n, C_IN * D_IN))

    flops = 2 * n * (HALF * LANES * 3 + 32 * LANES)
    bytes_accessed = 4 * (xf.size + _SLAB_ROWS * LANES + n * NCLS)

    return pl.pallas_call(
        ecg_kernel,
        out_shape=jax.ShapeDtypeStruct((n, NCLS), jnp.float32),
        in_specs=[pl.BlockSpec(memory_space=pltpu.MemorySpace.VMEM),
                  pl.BlockSpec(memory_space=pltpu.MemorySpace.VMEM)],
        out_specs=pl.BlockSpec(memory_space=pltpu.MemorySpace.VMEM),
        cost_estimate=pl.CostEstimate(flops=flops, transcendentals=0,
                                      bytes_accessed=bytes_accessed),
    )(xf, slab)


# ---- deterministic parameter init (PyTorch-style uniform fan-in bounds) ------
def init_params(key):
    ks = jax.random.split(key, 8)

    def u(k, shape, fan_in):
        bound = 1.0 / jnp.sqrt(jnp.float32(fan_in))
        return jax.random.uniform(k, shape, jnp.float32, -bound, bound)

    w1 = u(ks[0], (C1, C_IN, F), C_IN * F)
    b1 = u(ks[1], (C1,), C_IN * F)
    w2 = u(ks[2], (C2, C1, F), C1 * F)
    b2 = u(ks[3], (C2,), C1 * F)
    wl1 = u(ks[4], (HID, FLAT), FLAT)
    bl1 = u(ks[5], (HID,), FLAT)
    wl2 = u(ks[6], (NCLS, HID), HID)
    bl2 = u(ks[7], (NCLS,), HID)
    # BatchNorm affine + running stats (fresh module defaults)
    g1, be1 = jnp.ones((C1,), jnp.float32), jnp.zeros((C1,), jnp.float32)
    rm1, rv1 = jnp.zeros((C1,), jnp.float32), jnp.ones((C1,), jnp.float32)
    g2, be2 = jnp.ones((C2,), jnp.float32), jnp.zeros((C2,), jnp.float32)
    rm2, rv2 = jnp.zeros((C2,), jnp.float32), jnp.ones((C2,), jnp.float32)
    return (w1, b1, g1, be1, rm1, rv1, w2, b2, g2, be2, rm2, rv2,
            wl1, bl1, wl2, bl2)


# ---- pure-JAX reference in PyTorch NCL layout (for verification only) --------
def reference_forward(x, params):
    (w1, b1, g1, be1, rm1, rv1,
     w2, b2, g2, be2, rm2, rv2,
     wl1, bl1, wl2, bl2) = params

    def conv(x, w, b):
        N, Ci, L = x.shape
        Co, _, K = w.shape
        Lo = L - K + 1
        out = jnp.zeros((N, Co, Lo), jnp.float32)
        for k in range(K):
            out = out + jnp.einsum('ncl,oc->nol', x[:, :, k:k + Lo], w[:, :, k])
        return out + b[None, :, None]

    def bn(x, g, be, rm, rv):
        s = g * jax.lax.rsqrt(rv + EPS)
        return (x - rm[None, :, None]) * s[None, :, None] + be[None, :, None]

    def pool(x):
        N, C, L = x.shape
        Lp = L // 2
        return jnp.max(x[:, :, :2 * Lp].reshape(N, C, Lp, 2), axis=3)

    h = pool(bn(jnp.maximum(conv(x, w1, b1), 0.0), g1, be1, rm1, rv1))
    h = pool(bn(jnp.maximum(conv(h, w2, b2), 0.0), g2, be2, rm2, rv2))
    h = h.reshape(h.shape[0], -1)                        # channel-major flatten
    h = jnp.maximum(h @ wl1.T + bl1, 0.0)
    return h @ wl2.T + bl2


if __name__ == "__main__":
    key = jax.random.PRNGKey(0)
    kx, kp = jax.random.split(key)
    x = jax.random.normal(kx, (BATCH, C_IN, D_IN), jnp.float32)   # NCL input
    params = init_params(kp)
    slab = prepare_params(params)          # one-time packing / Toeplitz build

    out = jax.jit(simple_net_forward)(x, slab)
    out = jax.block_until_ready(out)

    ref = reference_forward(x, params)
    assert out.shape == (BATCH, NCLS)
    if not jnp.allclose(out, ref, atol=1e-4, rtol=1e-4):
        raise AssertionError("Pallas kernel mismatch vs JAX reference")
    print("KERNEL_OK")
</pallas_src>

<mosaic_0001>
module attributes {stable_mosaic.version = 11 : i64} {
  func.func @ecg_kernel(%arg0: memref<2x64xf32, #tpu.memory_space<vmem>>, %arg1: memref<232x128xf32, #tpu.memory_space<vmem>>, %arg2: memref<2x2xf32, #tpu.memory_space<vmem>>) attributes {dimension_semantics = [], scalar_prefetch = 0 : i64, scratch_operands = 0 : i64, tpu.core_type = #tpu.core_type<tc>} {
    %c0 = arith.constant 0 : index
    %c0_0 = arith.constant 0 : index
    %0 = vector.load %arg0[%c0, %c0_0] : memref<2x64xf32, #tpu.memory_space<vmem>>, vector<2x64xf32>
    %c0_1 = arith.constant 0 : index
    %c0_2 = arith.constant 0 : index
    %1 = vector.load %arg1[%c0_1, %c0_2] : memref<232x128xf32, #tpu.memory_space<vmem>>, vector<8x128xf32>
    %c8 = arith.constant 8 : index
    %c0_3 = arith.constant 0 : index
    %2 = vector.load %arg1[%c8, %c0_3] : memref<232x128xf32, #tpu.memory_space<vmem>>, vector<64x128xf32>
    %cst = arith.constant dense<0.000000e+00> : vector<2x128xf32>
    %3 = tpu.matmul %0, %2, %cst {dimension_numbers = #tpu.dot_dimension_numbers<[1], [0], [0], [1], [0, 0, 1, 1], [], []>} : vector<2x64xf32>, vector<64x128xf32>, vector<2x128xf32> -> vector<2x128xf32>
    %4 = vector.extract_strided_slice %1 {offsets = [0, 0], sizes = [1, 128], strides = [1, 1]} : vector<8x128xf32> to vector<1x128xf32>
    %5 = vector.broadcast %4 : vector<1x128xf32> to vector<2x128xf32>
    %6 = arith.addf %3, %5 : vector<2x128xf32>
    %cst_4 = arith.constant 0.000000e+00 : f32
    %7 = vector.broadcast %cst_4 : f32 to vector<2x128xf32>
    %8 = arith.maximumf %6, %7 : vector<2x128xf32>
    %9 = vector.extract_strided_slice %1 {offsets = [1, 0], sizes = [1, 128], strides = [1, 1]} : vector<8x128xf32> to vector<1x128xf32>
    %10 = vector.broadcast %9 : vector<1x128xf32> to vector<2x128xf32>
    %11 = arith.mulf %8, %10 : vector<2x128xf32>
    %12 = vector.extract_strided_slice %1 {offsets = [2, 0], sizes = [1, 128], strides = [1, 1]} : vector<8x128xf32> to vector<1x128xf32>
    %13 = vector.broadcast %12 : vector<1x128xf32> to vector<2x128xf32>
    %14 = arith.addf %11, %13 : vector<2x128xf32>
    %15 = vector.extract_strided_slice %14 {offsets = [0, 0], sizes = [2, 64], strides = [1, 1]} : vector<2x128xf32> to vector<2x64xf32>
    %16 = vector.extract_strided_slice %14 {offsets = [0, 64], sizes = [2, 64], strides = [1, 1]} : vector<2x128xf32> to vector<2x64xf32>
    %17 = arith.maximumf %15, %16 : vector<2x64xf32>
    %c72 = arith.constant 72 : index
    %c0_5 = arith.constant 0 : index
    %18 = vector.load %arg1[%c72, %c0_5] : memref<232x128xf32, #tpu.memory_space<vmem>>, vector<64x128xf32>
    %cst_6 = arith.constant dense<0.000000e+00> : vector<2x128xf32>
    %19 = tpu.matmul %17, %18, %cst_6 {dimension_numbers = #tpu.dot_dimension_numbers<[1], [0], [0], [1], [0, 0, 1, 1], [], []>} : vector<2x64xf32>, vector<64x128xf32>, vector<2x128xf32> -> vector<2x128xf32>
    %20 = vector.extract_strided_slice %1 {offsets = [3, 0], sizes = [1, 128], strides = [1, 1]} : vector<8x128xf32> to vector<1x128xf32>
    %21 = vector.broadcast %20 : vector<1x128xf32> to vector<2x128xf32>
    %22 = arith.addf %19, %21 : vector<2x128xf32>
    %cst_7 = arith.constant 0.000000e+00 : f32
    %23 = vector.broadcast %cst_7 : f32 to vector<2x128xf32>
    %24 = arith.maximumf %22, %23 : vector<2x128xf32>
    %25 = vector.extract_strided_slice %1 {offsets = [4, 0], sizes = [1, 128], strides = [1, 1]} : vector<8x128xf32> to vector<1x128xf32>
    %26 = vector.broadcast %25 : vector<1x128xf32> to vector<2x128xf32>
    %27 = arith.mulf %24, %26 : vector<2x128xf32>
    %28 = vector.extract_strided_slice %1 {offsets = [5, 0], sizes = [1, 128], strides = [1, 1]} : vector<8x128xf32> to vector<1x128xf32>
    %29 = vector.broadcast %28 : vector<1x128xf32> to vector<2x128xf32>
    %30 = arith.addf %27, %29 : vector<2x128xf32>
    %31 = vector.extract_strided_slice %30 {offsets = [0, 0], sizes = [2, 64], strides = [1, 1]} : vector<2x128xf32> to vector<2x64xf32>
    %32 = vector.extract_strided_slice %30 {offsets = [0, 64], sizes = [2, 64], strides = [1, 1]} : vector<2x128xf32> to vector<2x64xf32>
    %33 = arith.maximumf %31, %32 : vector<2x64xf32>
    %c136 = arith.constant 136 : index
    %c0_8 = arith.constant 0 : index
    %34 = vector.load %arg1[%c136, %c0_8] : memref<232x128xf32, #tpu.memory_space<vmem>>, vector<64x128xf32>
    %cst_9 = arith.constant dense<0.000000e+00> : vector<2x128xf32>
    %35 = tpu.matmul %33, %34, %cst_9 {dimension_numbers = #tpu.dot_dimension_numbers<[1], [0], [0], [1], [0, 0, 1, 1], [], []>} : vector<2x64xf32>, vector<64x128xf32>, vector<2x128xf32> -> vector<2x128xf32>
    %36 = vector.extract_strided_slice %1 {offsets = [6, 0], sizes = [1, 128], strides = [1, 1]} : vector<8x128xf32> to vector<1x128xf32>
    %37 = vector.broadcast %36 : vector<1x128xf32> to vector<2x128xf32>
    %38 = arith.addf %35, %37 : vector<2x128xf32>
    %cst_10 = arith.constant 0.000000e+00 : f32
    %39 = vector.broadcast %cst_10 : f32 to vector<2x128xf32>
    %40 = arith.maximumf %38, %39 : vector<2x128xf32>
    %41 = vector.extract_strided_slice %40 {offsets = [0, 0], sizes = [2, 32], strides = [1, 1]} : vector<2x128xf32> to vector<2x32xf32>
    %c200 = arith.constant 200 : index
    %c0_11 = arith.constant 0 : index
    %42 = vector.load %arg1[%c200, %c0_11] : memref<232x128xf32, #tpu.memory_space<vmem>>, vector<32x128xf32>
    %cst_12 = arith.constant dense<0.000000e+00> : vector<2x128xf32>
    %43 = tpu.matmul %41, %42, %cst_12 {dimension_numbers = #tpu.dot_dimension_numbers<[1], [0], [0], [1], [0, 0, 1, 1], [], []>} : vector<2x32xf32>, vector<32x128xf32>, vector<2x128xf32> -> vector<2x128xf32>
    %44 = vector.extract_strided_slice %1 {offsets = [7, 0], sizes = [1, 128], strides = [1, 1]} : vector<8x128xf32> to vector<1x128xf32>
    %45 = vector.broadcast %44 : vector<1x128xf32> to vector<2x128xf32>
    %46 = arith.addf %43, %45 : vector<2x128xf32>
    %47 = vector.extract_strided_slice %46 {offsets = [0, 0], sizes = [2, 2], strides = [1, 1]} : vector<2x128xf32> to vector<2x2xf32>
    %c0_13 = arith.constant 0 : index
    %c0_14 = arith.constant 0 : index
    %48 = vector.load %arg2[%c0_13, %c0_14] : memref<2x2xf32, #tpu.memory_space<vmem>>, vector<2x2xf32>
    tpu.vector_store %arg2[%c0_13, %c0_14], %47 {strides = array<i32>} : memref<2x2xf32, #tpu.memory_space<vmem>>, vector<2x2xf32>,
    return
  }
}

</mosaic_0001>

<llo_original>
// kernel: simple_net_forward.1
$region0: #{simple_net_forward.1}
  #allocation0 [shape = 'u32[]', space=smem, size = 0x4, offset = 0x4, fixed_abs, tag = 'smem constant byte address 0x4 - core index']
  #allocation1 [shape = 'u32[144,128]{1,0:T(1,128)}', space=vmem, size = 0x12000, scoped, tag = 'internal scratch']
  %s0 = inlined_call_operand.vmem [shape: f32[2,64], index: 0, kind: input, shape index: {}]
  %s1 = inlined_call_operand.hbm [shape: f32[232,128], index: 1, kind: input, shape index: {}]
  %s2 = inlined_call_operand.hbm [shape: f32[2,2], index: 2, kind: output, shape index: {}]
  %s3 = sld [smem:[#allocation0]]
  $region22: #{simple_net_forward.1} parent=0
    _
  %s5 = ssub.s32 1, %s3
  %s6 = scalar_select 0, %s5, %s3
  $region1: #{simple_net_forward.1} parent=0
    #allocation2 [shape = 'u8[118784]{0}', space=vmem, size = 0x1d000, scoped, tag = 'input window, operand 1, single buffered']
    #allocation3 [shape = 's32[1]{0}', space=sflag, size = 0x4, scoped, tag = 'scoped memory for simple_net_forward.1']
    #allocation4 [shape = 's32[1]{0}', space=sflag, size = 0x4, scoped, tag = 'scoped memory for simple_net_forward.1']
    #allocation5 [shape = 'u8[1024]{0}', space=vmem, size = 0x400, scoped, tag = 'output window, operand 0, single buffered']
    %7 = vsyncpa [#allocation3], 0
    %8 = vsyncpa [#allocation4], 0
    // Predicated region
    $region2: #{simple_net_forward.1} parent=1 // pred_check
      _
    $region3: #{simple_net_forward.1} parent=1 // pred_check_branch
      %10 = sbr.rel (0) target = $region5
    $region4: #{simple_net_forward.1} parent=1 // pred_region
      _
    $region5: #{simple_net_forward.1} parent=1 // pred_fallthru
      _
    // Predicated region
    $region6: #{simple_net_forward.1} parent=1 // pred_check
      _
    $region7: #{simple_net_forward.1} parent=1 // pred_check_branch
      %12 = sbr.rel (0) target = $region9
    $region8: #{simple_net_forward.1} parent=1 // pred_region
      %s14 = ssub.s32 3712, 3712
      %15 = vsyncadd [#allocation3], %s14
      %s16 = sshll.u32 [#allocation2], 4
      %s17 = int_to_ptr.vmem [resolvable:$true] %s16
      %22 = dma.hbm_to_vmem [thread:$0]  %s1, 3712, %s17, [#allocation3], 128, 128, 8
    $region9: #{simple_net_forward.1} parent=1 // pred_fallthru
      _
    // Predicated region
    $region10: #{simple_net_forward.1} parent=1 // pred_check
      _
    $region11: #{simple_net_forward.1} parent=1 // pred_check_branch
      %24 = sbr.rel (0) target = $region13
    $region12: #{simple_net_forward.1} parent=1 // pred_region
      %25 = dma.done [#allocation3], 3712
    $region13: #{simple_net_forward.1} parent=1 // pred_fallthru
      _
    %v26 = vld [vmem:[%s0] sm:$0x3]
    %v27 = vld [vmem:[#allocation2] sm:$0xff]
    %v28 = vld [vmem:[#allocation2 + $0x8] sm:$0xff]
    %v29 = vld [vmem:[#allocation2 + $0x10] sm:$0xff]
    %v30 = vld [vmem:[#allocation2 + $0x18] sm:$0xff]
    %v31 = vld [vmem:[#allocation2 + $0x20] sm:$0xff]
    %v32 = vld [vmem:[#allocation2 + $0x28] sm:$0xff]
    %v33 = vld [vmem:[#allocation2 + $0x30] sm:$0xff]
    %v34 = vld [vmem:[#allocation2 + $0x38] sm:$0xff]
    %v35 = vld [vmem:[#allocation2 + $0x40] sm:$0xff]
    %v36 = vlaneseq
    %v37 = vshrl.u32 %v36, 7
    %v38 = vsub.s32 0, %v37
    %v39 = vrot.slane %v27, %v38
    %vm40 = vcmask 523264
    %v42 = vsel %vm40, %v26, 0
    %44 = vmatprep.subr.mxu0 0.0
    %45 = vmatpush1.msra.mxu0 %v28
    %46 = vmatprep.subr.mxu0 0.0
    %47 = vmatpush1.msra.mxu0 %v29
    %48 = vmatprep.subr.mxu0 0.0
    %49 = vmatpush1.msra.mxu0 %v30
    %50 = vmatprep.subr.mxu0 0.0
    %51 = vmatpush1.msra.mxu0 %v31
    %52 = vmatprep.subr.mxu0 0.0
    %53 = vmatpush1.msra.mxu0 %v32
    %54 = vmatprep.subr.mxu0 0.0
    %55 = vmatpush1.msra.mxu0 %v33
    %56 = vmatprep.subr.mxu0 0.0
    %57 = vmatpush1.msra.mxu0 %v34
    %58 = vmatprep.subr.mxu0 0.0
    %59 = vmatpush1.msra.mxu0 %v35
    %60 = vmatprep.subr.mxu0 0.0
    %61 = vmatpush1.msra.mxu0 0.0
    %62 = vmatprep.subr.mxu0 0.0
    %63 = vmatpush1.msra.mxu0 0.0
    %64 = vmatprep.subr.mxu0 0.0
    %65 = vmatpush1.msra.mxu0 0.0
    %66 = vmatprep.subr.mxu0 0.0
    %67 = vmatpush1.msra.mxu0 0.0
    %68 = vmatprep.subr.mxu0 0.0
    %69 = vmatpush1.msra.mxu0 0.0
    %70 = vmatprep.subr.mxu0 0.0
    %71 = vmatpush1.msra.mxu0 0.0
    %72 = vmatprep.subr.mxu0 0.0
    %73 = vmatpush1.msra.mxu0 0.0
    %74 = vmatprep.subr.mxu0 0.0
    %75 = vmatpush1.msra.mxu0 0.0
    %76 = vmatprep.subr.mxu0 0.0
    %77 = vmatpush1.msra.mxu0 0.0
    %78 = vmatprep.subr.mxu0 0.0
    %79 = vmatpush1.msra.mxu0 0.0
    %80 = vmatprep.subr.mxu0 0.0
    %81 = vmatpush1.msra.mxu0 0.0
    %82 = vmatprep.subr.mxu0 0.0
    %83 = vmatpush1.msra.mxu0 0.0
    %84 = vmatprep.subr.mxu0 0.0
    %85 = vmatpush1.msra.mxu0 0.0
    %86 = vmatprep.subr.mxu0 0.0
    %87 = vmatpush1.msra.mxu0 0.0
    %88 = vmatprep.subr.mxu0 0.0
    %89 = vmatpush1.msra.mxu0 0.0
    %90 = vmatprep.subr.mxu0 0.0
    %91 = vmatpush1.msra.mxu0 0.0
    %92 = vmatprep.subr.mxu0 0.0
    %93 = vmatpush1.msra.mxu0 0.0
    %94 = vmatprep.subr.mxu0 0.0
    %95 = vmatpush1.msra.mxu0 0.0
    %96 = vmatprep.subr.mxu0 0.0
    %97 = vmatpush1.msra.mxu0 0.0
    %98 = vmatprep.subr.mxu0 0.0
    %99 = vmatpush1.msra.mxu0 0.0
    %100 = vmatprep.subr.mxu0 0.0
    %101 = vmatpush1.msra.mxu0 0.0
    %102 = vmatprep.subr.mxu0 0.0
    %103 = vmatpush1.msra.mxu0 0.0
    %104 = vmatprep.subr.mxu0 0.0
    %105 = vmatpush1.msra.mxu0 0.0
    %106 = vmatprep.subr.mxu0 0.0
    %107 = vmatpush1.msra.mxu0 0.0
    %108 = vmatprep.mubr.f32.mxu0 0.0
    %109 = vmatmul.mubr.f32.gmra.mrb[0].mxu0 %v42
    %v110 = vpop.f32.mrb[0].mxu0
    %v111 = vadd.f32 %v39, %v110
    %v112 = vpop.f32.mrb[0].mxu0
    %113 = vdwg.mxu0
    %v114 = vmax.f32 %v111, 0.0
    %v115 = vlaneseq
    %v116 = vshrl.u32 %v115, 7
    %v117 = vsub.s32 1, %v116
    %v118 = vrot.slane %v27, %v117
    %v119 = vmul.f32 %v114, %v118
    %v120 = vlaneseq
    %v121 = vshrl.u32 %v120, 7
    %v122 = vsub.s32 2, %v121
    %v123 = vrot.slane %v27, %v122
    %v124 = vadd.f32 %v119, %v123
    %126 = vrot.lane.b32.xlu0 %v124, 64
    %v127 = vpop.permute.xlu0 %126
    %v129 = vmax.f32 %v124, %v127
    %v130 = vld [vmem:[#allocation2 + $0x48] sm:$0xff]
    %v131 = vld [vmem:[#allocation2 + $0x50] sm:$0xff]
    %v132 = vld [vmem:[#allocation2 + $0x58] sm:$0xff]
    %v133 = vld [vmem:[#allocation2 + $0x60] sm:$0xff]
    %v134 = vld [vmem:[#allocation2 + $0x68] sm:$0xff]
    %v135 = vld [vmem:[#allocation2 + $0x70] sm:$0xff]
    %v136 = vld [vmem:[#allocation2 + $0x78] sm:$0xff]
    %v137 = vld [vmem:[#allocation2 + $0x80] sm:$0xff]
    %v138 = vlaneseq
    %v139 = vshrl.u32 %v138, 7
    %v140 = vsub.s32 3, %v139
    %v141 = vrot.slane %v27, %v140
    %v143 = vsel %vm40, %v129, 0
    %145 = vmatprep.subr.mxu0 0.0
    %146 = vmatpush1.msra.mxu0 %v130
    %147 = vmatprep.subr.mxu0 0.0
    %148 = vmatpush1.msra.mxu0 %v131
    %149 = vmatprep.subr.mxu0 0.0
    %150 = vmatpush1.msra.mxu0 %v132
    %151 = vmatprep.subr.mxu0 0.0
    %152 = vmatpush1.msra.mxu0 %v133
    %153 = vmatprep.subr.mxu0 0.0
    %154 = vmatpush1.msra.mxu0 %v134
    %155 = vmatprep.subr.mxu0 0.0
    %156 = vmatpush1.msra.mxu0 %v135
    %157 = vmatprep.subr.mxu0 0.0
    %158 = vmatpush1.msra.mxu0 %v136
    %159 = vmatprep.subr.mxu0 0.0
    %160 = vmatpush1.msra.mxu0 %v137
    %161 = vmatprep.subr.mxu0 0.0
    %162 = vmatpush1.msra.mxu0 0.0
    %163 = vmatprep.subr.mxu0 0.0
    %164 = vmatpush1.msra.mxu0 0.0
    %165 = vmatprep.subr.mxu0 0.0
    %166 = vmatpush1.msra.mxu0 0.0
    %167 = vmatprep.subr.mxu0 0.0
    %168 = vmatpush1.msra.mxu0 0.0
    %169 = vmatprep.subr.mxu0 0.0
    %170 = vmatpush1.msra.mxu0 0.0
    %171 = vmatprep.subr.mxu0 0.0
    %172 = vmatpush1.msra.mxu0 0.0
    %173 = vmatprep.subr.mxu0 0.0
    %174 = vmatpush1.msra.mxu0 0.0
    %175 = vmatprep.subr.mxu0 0.0
    %176 = vmatpush1.msra.mxu0 0.0
    %177 = vmatprep.subr.mxu0 0.0
    %178 = vmatpush1.msra.mxu0 0.0
    %179 = vmatprep.subr.mxu0 0.0
    %180 = vmatpush1.msra.mxu0 0.0
    %181 = vmatprep.subr.mxu0 0.0
    %182 = vmatpush1.msra.mxu0 0.0
    %183 = vmatprep.subr.mxu0 0.0
    %184 = vmatpush1.msra.mxu0 0.0
    %185 = vmatprep.subr.mxu0 0.0
    %186 = vmatpush1.msra.mxu0 0.0
    %187 = vmatprep.subr.mxu0 0.0
    %188 = vmatpush1.msra.mxu0 0.0
    %189 = vmatprep.subr.mxu0 0.0
    %190 = vmatpush1.msra.mxu0 0.0
    %191 = vmatprep.subr.mxu0 0.0
    %192 = vmatpush1.msra.mxu0 0.0
    %193 = vmatprep.subr.mxu0 0.0
    %194 = vmatpush1.msra.mxu0 0.0
    %195 = vmatprep.subr.mxu0 0.0
    %196 = vmatpush1.msra.mxu0 0.0
    %197 = vmatprep.subr.mxu0 0.0
    %198 = vmatpush1.msra.mxu0 0.0
    %199 = vmatprep.subr.mxu0 0.0
    %200 = vmatpush1.msra.mxu0 0.0
    %201 = vmatprep.subr.mxu0 0.0
    %202 = vmatpush1.msra.mxu0 0.0
    %203 = vmatprep.subr.mxu0 0.0
    %204 = vmatpush1.msra.mxu0 0.0
    %205 = vmatprep.subr.mxu0 0.0
    %206 = vmatpush1.msra.mxu0 0.0
    %207 = vmatprep.subr.mxu0 0.0
    %208 = vmatpush1.msra.mxu0 0.0
    %209 = vmatprep.mubr.f32.mxu0 0.0
    %210 = vmatmul.mubr.f32.gmra.mrb[0].mxu0 %v143
    %v211 = vpop.f32.mrb[0].mxu0
    %v212 = vadd.f32 %v141, %v211
    %v213 = vpop.f32.mrb[0].mxu0
    %214 = vdwg.mxu0
    %v215 = vmax.f32 %v212, 0.0
    %v216 = vlaneseq
    %v217 = vshrl.u32 %v216, 7
    %v218 = vsub.s32 4, %v217
    %v219 = vrot.slane %v27, %v218
    %v220 = vmul.f32 %v215, %v219
    %v221 = vlaneseq
    %v222 = vshrl.u32 %v221, 7
    %v223 = vsub.s32 5, %v222
    %v224 = vrot.slane %v27, %v223
    %v225 = vadd.f32 %v220, %v224
    %227 = vrot.lane.b32.xlu0 %v225, 64
    %v228 = vpop.permute.xlu0 %227
    %v230 = vmax.f32 %v225, %v228
    %v231 = vld [vmem:[#allocation2 + $0x88] sm:$0xff]
    %v232 = vld [vmem:[#allocation2 + $0x90] sm:$0xff]
    %v233 = vld [vmem:[#allocation2 + $0x98] sm:$0xff]
    %v234 = vld [vmem:[#allocation2 + $0xa0] sm:$0xff]
    %v235 = vld [vmem:[#allocation2 + $0xa8] sm:$0xff]
    %v236 = vld [vmem:[#allocation2 + $0xb0] sm:$0xff]
    %v237 = vld [vmem:[#allocation2 + $0xb8] sm:$0xff]
    %v238 = vld [vmem:[#allocation2 + $0xc0] sm:$0xff]
    %v239 = vlaneseq
    %v240 = vshrl.u32 %v239, 7
    %v241 = vsub.s32 6, %v240
    %v242 = vrot.slane %v27, %v241
    %v244 = vsel %vm40, %v230, 0
    %246 = vmatprep.subr.mxu0 0.0
    %247 = vmatpush1.msra.mxu0 %v231
    %248 = vmatprep.subr.mxu0 0.0
    %249 = vmatpush1.msra.mxu0 %v232
    %250 = vmatprep.subr.mxu0 0.0
    %251 = vmatpush1.msra.mxu0 %v233
    %252 = vmatprep.subr.mxu0 0.0
    %253 = vmatpush1.msra.mxu0 %v234
    %254 = vmatprep.subr.mxu0 0.0
    %255 = vmatpush1.msra.mxu0 %v235
    %256 = vmatprep.subr.mxu0 0.0
    %257 = vmatpush1.msra.mxu0 %v236
    %258 = vmatprep.subr.mxu0 0.0
    %259 = vmatpush1.msra.mxu0 %v237
    %260 = vmatprep.subr.mxu0 0.0
    %261 = vmatpush1.msra.mxu0 %v238
    %262 = vmatprep.subr.mxu0 0.0
    %263 = vmatpush1.msra.mxu0 0.0
    %264 = vmatprep.subr.mxu0 0.0
    %265 = vmatpush1.msra.mxu0 0.0
    %266 = vmatprep.subr.mxu0 0.0
    %267 = vmatpush1.msra.mxu0 0.0
    %268 = vmatprep.subr.mxu0 0.0
    %269 = vmatpush1.msra.mxu0 0.0
    %270 = vmatprep.subr.mxu0 0.0
    %271 = vmatpush1.msra.mxu0 0.0
    %272 = vmatprep.subr.mxu0 0.0
    %273 = vmatpush1.msra.mxu0 0.0
    %274 = vmatprep.subr.mxu0 0.0
    %275 = vmatpush1.msra.mxu0 0.0
    %276 = vmatprep.subr.mxu0 0.0
    %277 = vmatpush1.msra.mxu0 0.0
    %278 = vmatprep.subr.mxu0 0.0
    %279 = vmatpush1.msra.mxu0 0.0
    %280 = vmatprep.subr.mxu0 0.0
    %281 = vmatpush1.msra.mxu0 0.0
    %282 = vmatprep.subr.mxu0 0.0
    %283 = vmatpush1.msra.mxu0 0.0
    %284 = vmatprep.subr.mxu0 0.0
    %285 = vmatpush1.msra.mxu0 0.0
    %286 = vmatprep.subr.mxu0 0.0
    %287 = vmatpush1.msra.mxu0 0.0
    %288 = vmatprep.subr.mxu0 0.0
    %289 = vmatpush1.msra.mxu0 0.0
    %290 = vmatprep.subr.mxu0 0.0
    %291 = vmatpush1.msra.mxu0 0.0
    %292 = vmatprep.subr.mxu0 0.0
    %293 = vmatpush1.msra.mxu0 0.0
    %294 = vmatprep.subr.mxu0 0.0
    %295 = vmatpush1.msra.mxu0 0.0
    %296 = vmatprep.subr.mxu0 0.0
    %297 = vmatpush1.msra.mxu0 0.0
    %298 = vmatprep.subr.mxu0 0.0
    %299 = vmatpush1.msra.mxu0 0.0
    %300 = vmatprep.subr.mxu0 0.0
    %301 = vmatpush1.msra.mxu0 0.0
    %302 = vmatprep.subr.mxu0 0.0
    %303 = vmatpush1.msra.mxu0 0.0
    %304 = vmatprep.subr.mxu0 0.0
    %305 = vmatpush1.msra.mxu0 0.0
    %306 = vmatprep.subr.mxu0 0.0
    %307 = vmatpush1.msra.mxu0 0.0
    %308 = vmatprep.subr.mxu0 0.0
    %309 = vmatpush1.msra.mxu0 0.0
    %310 = vmatprep.mubr.f32.mxu0 0.0
    %311 = vmatmul.mubr.f32.gmra.mrb[0].mxu0 %v244
    %v312 = vpop.f32.mrb[0].mxu0
    %v313 = vadd.f32 %v242, %v312
    %v314 = vpop.f32.mrb[0].mxu0
    %315 = vdwg.mxu0
    %v316 = vmax.f32 %v313, 0.0
    %v317 = vld [vmem:[#allocation2 + $0xc8] sm:$0xff]
    %v318 = vld [vmem:[#allocation2 + $0xd0] sm:$0xff]
    %v319 = vld [vmem:[#allocation2 + $0xd8] sm:$0xff]
    %v320 = vld [vmem:[#allocation2 + $0xe0] sm:$0xff]
    %v321 = vlaneseq
    %v322 = vshrl.u32 %v321, 7
    %v323 = vsub.s32 7, %v322
    %v324 = vrot.slane %v27, %v323
    %vm325 = vcmask 261120
    %v327 = vsel %vm325, %v316, 0
    %329 = vmatprep.subr.mxu0 0.0
    %330 = vmatpush1.msra.mxu0 %v317
    %331 = vmatprep.subr.mxu0 0.0
    %332 = vmatpush1.msra.mxu0 %v318
    %333 = vmatprep.subr.mxu0 0.0
    %334 = vmatpush1.msra.mxu0 %v319
    %335 = vmatprep.subr.mxu0 0.0
    %336 = vmatpush1.msra.mxu0 %v320
    %337 = vmatprep.subr.mxu0 0.0
    %338 = vmatpush1.msra.mxu0 0.0
    %339 = vmatprep.subr.mxu0 0.0
    %340 = vmatpush1.msra.mxu0 0.0
    %341 = vmatprep.subr.mxu0 0.0
    %342 = vmatpush1.msra.mxu0 0.0
    %343 = vmatprep.subr.mxu0 0.0
    %344 = vmatpush1.msra.mxu0 0.0
    %345 = vmatprep.subr.mxu0 0.0
    %346 = vmatpush1.msra.mxu0 0.0
    %347 = vmatprep.subr.mxu0 0.0
    %348 = vmatpush1.msra.mxu0 0.0
    %349 = vmatprep.subr.mxu0 0.0
    %350 = vmatpush1.msra.mxu0 0.0
    %351 = vmatprep.subr.mxu0 0.0
    %352 = vmatpush1.msra.mxu0 0.0
    %353 = vmatprep.subr.mxu0 0.0
    %354 = vmatpush1.msra.mxu0 0.0
    %355 = vmatprep.subr.mxu0 0.0
    %356 = vmatpush1.msra.mxu0 0.0
    %357 = vmatprep.subr.mxu0 0.0
    %358 = vmatpush1.msra.mxu0 0.0
    %359 = vmatprep.subr.mxu0 0.0
    %360 = vmatpush1.msra.mxu0 0.0
    %361 = vmatprep.subr.mxu0 0.0
    %362 = vmatpush1.msra.mxu0 0.0
    %363 = vmatprep.subr.mxu0 0.0
    %364 = vmatpush1.msra.mxu0 0.0
    %365 = vmatprep.subr.mxu0 0.0
    %366 = vmatpush1.msra.mxu0 0.0
    %367 = vmatprep.subr.mxu0 0.0
    %368 = vmatpush1.msra.mxu0 0.0
    %369 = vmatprep.subr.mxu0 0.0
    %370 = vmatpush1.msra.mxu0 0.0
    %371 = vmatprep.subr.mxu0 0.0
    %372 = vmatpush1.msra.mxu0 0.0
    %373 = vmatprep.subr.mxu0 0.0
    %374 = vmatpush1.msra.mxu0 0.0
    %375 = vmatprep.subr.mxu0 0.0
    %376 = vmatpush1.msra.mxu0 0.0
    %377 = vmatprep.subr.mxu0 0.0
    %378 = vmatpush1.msra.mxu0 0.0
    %379 = vmatprep.subr.mxu0 0.0
    %380 = vmatpush1.msra.mxu0 0.0
    %381 = vmatprep.subr.mxu0 0.0
    %382 = vmatpush1.msra.mxu0 0.0
    %383 = vmatprep.subr.mxu0 0.0
    %384 = vmatpush1.msra.mxu0 0.0
    %385 = vmatprep.subr.mxu0 0.0
    %386 = vmatpush1.msra.mxu0 0.0
    %387 = vmatprep.subr.mxu0 0.0
    %388 = vmatpush1.msra.mxu0 0.0
    %389 = vmatprep.subr.mxu0 0.0
    %390 = vmatpush1.msra.mxu0 0.0
    %391 = vmatprep.subr.mxu0 0.0
    %392 = vmatpush1.msra.mxu0 0.0
    %393 = vmatprep.mubr.f32.mxu0 0.0
    %394 = vmatmul.mubr.f32.gmra.mrb[0].mxu0 %v327
    %v395 = vpop.f32.mrb[0].mxu0
    %v396 = vadd.f32 %v324, %v395
    %v397 = vpop.f32.mrb[0].mxu0
    %398 = vdwg.mxu0
    %vm399 = vcmask 9216
    %400 = vst.msk [vmem:[#allocation5] sm:$0x3] %vm399, %v396
    // Predicated region
    $region14: #{simple_net_forward.1} parent=1 // pred_check
      _
    $region15: #{simple_net_forward.1} parent=1 // pred_check_branch
      %402 = sbr.rel (0) target = $region17
    $region16: #{simple_net_forward.1} parent=1 // pred_region
      %s404 = ssub.s32 32, 32
      %405 = vsyncadd [#allocation4], %s404
      %s407 = sshll.u32 [#allocation5], 4
      %s408 = int_to_ptr.vmem [resolvable:$true] %s407
      %410 = dma.vmem_to_hbm [thread:$0]  %s408, 32, %s2, [#allocation4]
    $region17: #{simple_net_forward.1} parent=1 // pred_fallthru
      _
    // Predicated region
    $region18: #{simple_net_forward.1} parent=1 // pred_check
      _
    $region19: #{simple_net_forward.1} parent=1 // pred_check_branch
      %412 = sbr.rel (0) target = $region21
    $region20: #{simple_net_forward.1} parent=1 // pred_region
      %413 = dma.done [#allocation4], 32
    $region21: #{simple_net_forward.1} parent=1 // pred_fallthru
      _
    %414 = vsyncpa [#allocation3], 1
    %415 = vsyncpa [#allocation4], 1

</llo_original>
